<compile_context>
chip_gen: v7x
topology: tpu7x:2x2x1
jax: 0.10.0
libtpu: 0.0.40
codegen_flags: <defaults>
</compile_context>

<pallas_src>
import jax
import jax.numpy as jnp
from jax.experimental import pallas as pl
from jax.experimental.pallas import tpu as pltpu

NEG_SLOPE = 0.2
BN_EPS = 1e-5
LANE = 128
SUB = 8
TM_MAX = 512
VMEM_LIMIT = 32 * 1024 * 1024
_VMEM = pltpu.MemorySpace.VMEM


def _round_up(x, m):
    return (x + m - 1) // m * m


def _pick_m(m):
    """Return (padded M, M tile size); >= 2 tiles once m exceeds TM_MAX."""
    m_pad = _round_up(m, SUB)
    if m_pad <= TM_MAX:
        return m_pad, m_pad
    n_tiles = -(-m_pad // TM_MAX)
    tm = _round_up(-(-m_pad // n_tiles), SUB)
    return tm * n_tiles, tm


# ---------------------------------------------------------------------------
# Pallas kernels
# ---------------------------------------------------------------------------
def _conv_act_kernel(p_ref, w_ref, b_ref, o_ref):
    """Conv-as-matmul (full-K resident weight) + bias + LeakyReLU. grid=(M,)."""
    y = jnp.dot(p_ref[...], w_ref[...], preferred_element_type=jnp.float32)
    y = y + b_ref[...]
    o_ref[...] = jnp.where(y >= 0, y, NEG_SLOPE * y).astype(o_ref.dtype)


def _conv_stats_kernel(p_ref, w_ref, b_ref, y_ref, stats_ref):
    """Conv-as-matmul + bias; emits bf16 pre-activation and per-tile
    per-channel (sum, sumsq) partial BatchNorm statistics (f32). grid=(M,)."""
    y = jnp.dot(p_ref[...], w_ref[...], preferred_element_type=jnp.float32)
    y = y + b_ref[...]
    y_ref[...] = y.astype(y_ref.dtype)
    s = jnp.sum(y, axis=0, keepdims=True)        # (1, C)
    ss = jnp.sum(y * y, axis=0, keepdims=True)   # (1, C)
    stats_ref[...] = jnp.concatenate([s, ss], axis=0)[None]  # (1, 2, C)


def _bn_act_kernel(y_ref, scale_ref, shift_ref, o_ref):
    """Apply precomputed per-channel scale/shift + LeakyReLU. grid=(M,)."""
    y = y_ref[...].astype(jnp.float32) * scale_ref[...] + shift_ref[...]
    o_ref[...] = jnp.where(y >= 0, y, NEG_SLOPE * y).astype(o_ref.dtype)


def _head_kernel(x_ref, w1_ref, b1_ref, w2_ref, b2_ref, o_ref):
    """AdaptiveAvgPool(1) + Conv1x1(512->1024) + LReLU + Conv1x1(1024->1,
    lane-padded to 128) + sigmoid.  bf16 matmuls, f32 accumulation."""
    pooled = jnp.mean(x_ref[...].astype(jnp.float32), axis=1)   # (N, C)
    h = jnp.dot(pooled.astype(jnp.bfloat16), w1_ref[...],
                preferred_element_type=jnp.float32) + b1_ref[...]
    h = jnp.where(h >= 0, h, NEG_SLOPE * h)
    y = jnp.dot(h.astype(jnp.bfloat16), w2_ref[...],
                preferred_element_type=jnp.float32) + b2_ref[...]
    o_ref[...] = jax.nn.sigmoid(y)


# ---------------------------------------------------------------------------
# Pallas wrappers
# ---------------------------------------------------------------------------
def conv_act(patches, w_mat, bias, *, tm):
    m_pad, kdim = patches.shape
    cpad = w_mat.shape[1]
    return pl.pallas_call(
        _conv_act_kernel,
        out_shape=jax.ShapeDtypeStruct((m_pad, cpad), jnp.bfloat16),
        grid=(m_pad // tm,),
        in_specs=[pl.BlockSpec((tm, kdim), lambda i: (i, 0)),
                  pl.BlockSpec((kdim, cpad), lambda i: (0, 0)),   # resident W
                  pl.BlockSpec((1, cpad), lambda i: (0, 0))],
        out_specs=pl.BlockSpec((tm, cpad), lambda i: (i, 0)),
        compiler_params=pltpu.CompilerParams(
            dimension_semantics=("parallel",),
            vmem_limit_bytes=VMEM_LIMIT),
    )(patches, w_mat, bias)


def conv_stats(patches, w_mat, bias, *, tm):
    m_pad, kdim = patches.shape
    cpad = w_mat.shape[1]
    m_tiles = m_pad // tm
    return pl.pallas_call(
        _conv_stats_kernel,
        out_shape=(jax.ShapeDtypeStruct((m_pad, cpad), jnp.bfloat16),
                   jax.ShapeDtypeStruct((m_tiles, 2, cpad), jnp.float32)),
        grid=(m_tiles,),
        in_specs=[pl.BlockSpec((tm, kdim), lambda i: (i, 0)),
                  pl.BlockSpec((kdim, cpad), lambda i: (0, 0)),   # resident W
                  pl.BlockSpec((1, cpad), lambda i: (0, 0))],
        out_specs=[pl.BlockSpec((tm, cpad), lambda i: (i, 0)),
                   pl.BlockSpec((1, 2, cpad), lambda i: (i, 0, 0))],
        compiler_params=pltpu.CompilerParams(
            dimension_semantics=("parallel",),
            vmem_limit_bytes=VMEM_LIMIT),
    )(patches, w_mat, bias)


def bn_act(y, scale, shift, *, tm):
    m_pad, cpad = y.shape
    return pl.pallas_call(
        _bn_act_kernel,
        out_shape=jax.ShapeDtypeStruct((m_pad, cpad), jnp.bfloat16),
        grid=(m_pad // tm,),
        in_specs=[pl.BlockSpec((tm, cpad), lambda i: (i, 0)),
                  pl.BlockSpec((1, cpad), lambda i: (0, 0)),
                  pl.BlockSpec((1, cpad), lambda i: (0, 0))],
        out_specs=pl.BlockSpec((tm, cpad), lambda i: (i, 0)),
        compiler_params=pltpu.CompilerParams(
            dimension_semantics=("parallel",),
            vmem_limit_bytes=VMEM_LIMIT),
    )(y, scale, shift)


def head(x_flat, w1, b1, w2p, b2p):
    n = x_flat.shape[0]
    return pl.pallas_call(
        _head_kernel,
        out_shape=jax.ShapeDtypeStruct((n, LANE), jnp.float32),
        in_specs=[pl.BlockSpec(memory_space=_VMEM)] * 5,
        out_specs=pl.BlockSpec(memory_space=_VMEM),
        compiler_params=pltpu.CompilerParams(vmem_limit_bytes=VMEM_LIMIT),
    )(x_flat, w1, b1, w2p, b2p)


# ---------------------------------------------------------------------------
# JAX glue: im2col, parameters, forward pass
# ---------------------------------------------------------------------------
def _im2col(x, stride, ho, wo, kdim, m_pad):
    """x: (N,H,W,C) bf16, 3x3 kernel, padding=1 -> (m_pad, kdim) bf16."""
    n, h, w, c = x.shape
    xp = jnp.pad(x, ((0, 0), (1, 1), (1, 1), (0, 0)))
    cols = []
    for dh in range(3):
        for dw in range(3):
            cols.append(xp[:, dh:dh + stride * (ho - 1) + 1:stride,
                              dw:dw + stride * (wo - 1) + 1:stride, :])
    patches = jnp.concatenate(cols, axis=-1).reshape(n * ho * wo, 9 * c)
    m, kraw = patches.shape
    return jnp.pad(patches, ((0, m_pad - m), (0, kdim - kraw)))


_CONV_CFG = [
    # (cin, cout, stride, use_bn)
    (3, 64, 1, False),
    (64, 64, 2, True),
    (64, 128, 1, True),
    (128, 128, 2, True),
    (128, 256, 1, True),
    (256, 256, 2, True),
    (256, 512, 1, True),
    (512, 512, 2, True),
]


def init_params(key):
    params = []
    for cin, cout, stride, use_bn in _CONV_CFG:
        key, k1, k2, k3, k4 = jax.random.split(key, 5)
        w = jax.random.normal(k1, (3, 3, cin, cout), jnp.float32) / jnp.sqrt(9.0 * cin)
        b = 0.01 * jax.random.normal(k2, (1, cout), jnp.float32)
        if use_bn:
            g = 1.0 + 0.1 * jax.random.normal(k3, (1, cout), jnp.float32)
            bt = 0.1 * jax.random.normal(k4, (1, cout), jnp.float32)
        else:
            g = jnp.ones((1, cout), jnp.float32)
            bt = jnp.zeros((1, cout), jnp.float32)
        params.append(dict(w=w, b=b, g=g, bt=bt, stride=stride, bn=use_bn))
    key, k1, k2, k3, k4 = jax.random.split(key, 5)
    head_p = dict(
        w1=jax.random.normal(k1, (512, 1024), jnp.float32) / jnp.sqrt(512.0),
        b1=0.01 * jax.random.normal(k2, (1, 1024), jnp.float32),
        w2=jax.random.normal(k3, (1024, 1), jnp.float32) / jnp.sqrt(1024.0),
        b2=0.01 * jax.random.normal(k4, (1, 1), jnp.float32),
    )
    return params, head_p


def prepare_conv_params(raw_params):
    """Hoisted, matmul-ready, lane-padded bf16 weights + padded BN params."""
    prepared = []
    cin_seen = 3  # channels actually fed to this layer (incl. lane padding)
    for p in raw_params:
        cin = p["w"].shape[2]
        cout = p["w"].shape[3]
        cpad = _round_up(cout, LANE)
        kraw = 9 * cin_seen
        kdim = _round_up(kraw, 32)      # sublane alignment only; no 128-lane pad
        w_full = jnp.zeros((3, 3, cin_seen, cpad), jnp.float32)
        w_full = w_full.at[:, :, :cin, :cout].set(p["w"])
        w_mat = w_full.reshape(kraw, cpad)
        if kdim > kraw:
            w_mat = jnp.pad(w_mat, ((0, kdim - kraw), (0, 0)))
        b = jnp.zeros((1, cpad), jnp.float32).at[:, :cout].set(p["b"])
        g = jnp.ones((1, cpad), jnp.float32).at[:, :cout].set(p["g"])
        bt = jnp.zeros((1, cpad), jnp.float32).at[:, :cout].set(p["bt"])
        prepared.append(dict(w_mat=w_mat.astype(jnp.bfloat16), b=b, g=g, bt=bt,
                             stride=p["stride"], bn=p["bn"],
                             cout=cout, cpad=cpad, kdim=kdim))
        cin_seen = cpad
    return prepared


def prepare_head_params(raw_head):
    w2p = jnp.zeros((1024, LANE), jnp.float32).at[:, :1].set(raw_head["w2"])
    b2p = jnp.zeros((1, LANE), jnp.float32).at[:, :1].set(raw_head["b2"])
    return dict(w1=raw_head["w1"].astype(jnp.bfloat16), b1=raw_head["b1"],
                w2p=w2p.astype(jnp.bfloat16), b2p=b2p)


def discriminator_forward(x_nchw, params, head_p):
    x = jnp.transpose(x_nchw, (0, 2, 3, 1)).astype(jnp.bfloat16)  # NCHW -> NHWC
    n = x.shape[0]
    for lp in params:
        _, h, w, _ = x.shape
        stride = lp["stride"]
        ho = (h + 2 - 3) // stride + 1
        wo = (w + 2 - 3) // stride + 1
        m = n * ho * wo
        m_pad, tm = _pick_m(m)
        patches = _im2col(x, stride, ho, wo, lp["kdim"], m_pad)
        if lp["bn"]:
            y, stats = conv_stats(patches, lp["w_mat"], lp["b"], tm=tm)
            pad_rows = float(m_pad - m)
            # Padded patch rows are all-zero -> their pre-activation equals the
            # bias exactly; remove that contribution from the statistics.
            s = jnp.sum(stats[:, 0, :], axis=0, keepdims=True) - pad_rows * lp["b"]
            ss = jnp.sum(stats[:, 1, :], axis=0, keepdims=True) \
                - pad_rows * lp["b"] * lp["b"]
            mean = s / m
            var = jnp.maximum(ss / m - mean * mean, 0.0)   # biased batch variance
            scale = lp["g"] * jax.lax.rsqrt(var + BN_EPS)
            shift = lp["bt"] - mean * scale
            out = bn_act(y, scale, shift, tm=tm)
        else:
            out = conv_act(patches, lp["w_mat"], lp["b"], tm=tm)
        x = out[:m].reshape(n, ho, wo, lp["cpad"])
    nb, hh, ww, cc = x.shape
    x_flat = x.reshape(nb, hh * ww, cc)   # last layer: cc == 512 (no padding)
    logits = head(x_flat, head_p["w1"], head_p["b1"], head_p["w2p"], head_p["b2p"])
    return logits[:, :1]                  # == torch .view(batch, -1)


def reference_forward(x_nchw, raw_params, raw_head):
    """Pure-JAX reference with the same precision policy as the kernels
    (bf16 conv inputs, f32 accumulation, f32 BN stats, bf16 stored
    pre-activation, bf16 inter-layer activations, bf16 head matmuls)."""
    x = jnp.transpose(x_nchw, (0, 2, 3, 1)).astype(jnp.bfloat16)
    for p in raw_params:
        y = jax.lax.conv_general_dilated(
            x, p["w"].astype(jnp.bfloat16),
            window_strides=(p["stride"], p["stride"]),
            padding=((1, 1), (1, 1)),
            dimension_numbers=("NHWC", "HWIO", "NHWC"),
            preferred_element_type=jnp.float32)
        y = y + p["b"].reshape(1, 1, 1, -1)
        if p["bn"]:
            mu = jnp.mean(y, axis=(0, 1, 2), keepdims=True)
            var = jnp.maximum(
                jnp.mean(y * y, axis=(0, 1, 2), keepdims=True) - mu * mu, 0.0)
            scale = p["g"].reshape(1, 1, 1, -1) * jax.lax.rsqrt(var + BN_EPS)
            shift = p["bt"].reshape(1, 1, 1, -1) - mu * scale
            yq = y.astype(jnp.bfloat16).astype(jnp.float32)
            y = yq * scale + shift
        x = jnp.where(y >= 0, y, NEG_SLOPE * y).astype(jnp.bfloat16)
    pooled = jnp.mean(x.astype(jnp.float32), axis=(1, 2))
    h = jnp.dot(pooled.astype(jnp.bfloat16), raw_head["w1"].astype(jnp.bfloat16),
                preferred_element_type=jnp.float32) + raw_head["b1"]
    h = jnp.where(h >= 0, h, NEG_SLOPE * h)
    y = jnp.dot(h.astype(jnp.bfloat16), raw_head["w2"].astype(jnp.bfloat16),
                preferred_element_type=jnp.float32) + raw_head["b2"]
    return jax.nn.sigmoid(y)


if __name__ == "__main__":
    key = jax.random.PRNGKey(0)
    kp, kx = jax.random.split(key)
    raw_params, raw_head = init_params(kp)
    params = prepare_conv_params(raw_params)
    head_p = prepare_head_params(raw_head)

    # PyTorch-style input: NCHW, 3 channels (first conv expects 3).
    x = jax.random.normal(kx, (2, 3, 16, 16), jnp.float32)

    out = discriminator_forward(x, params, head_p)
    out = jax.block_until_ready(out)

    ref = reference_forward(x, raw_params, raw_head)
    assert out.shape == (2, 1), out.shape
    assert bool(jnp.all(jnp.isfinite(out)))
    assert jnp.allclose(out, ref, atol=2e-2, rtol=2e-2), (out, ref)

    print("KERNEL_OK")
</pallas_src>

<mosaic_0001>
module attributes {stable_mosaic.version = 11 : i64} {
  func.func @_conv_act_kernel(%arg0: i32, %arg1: memref<512x32xbf16, #tpu.memory_space<vmem>>, %arg2: memref<32x128xbf16, #tpu.memory_space<vmem>>, %arg3: memref<1x128xf32, #tpu.memory_space<vmem>>, %arg4: memref<512x128xbf16, #tpu.memory_space<vmem>>) attributes {dimension_semantics = [#tpu.dimension_semantics<parallel>], iteration_bounds = array<i64: 1>, scalar_prefetch = 0 : i64, scratch_operands = 0 : i64, tpu.core_type = #tpu.core_type<tc>, window_params = [{transform_indices = @transform_0, window_bounds = array<i64: 512, 32>}, {pipeline_mode = #tpu.pipeline_mode<synchronous>, transform_indices = @transform_1, window_bounds = array<i64: 32, 128>}, {pipeline_mode = #tpu.pipeline_mode<synchronous>, transform_indices = @transform_2, window_bounds = array<i64: 1, 128>}, {transform_indices = @transform_3, window_bounds = array<i64: 512, 128>}]} {
    %c0 = arith.constant 0 : index
    %c0_0 = arith.constant 0 : index
    %0 = vector.load %arg1[%c0, %c0_0] : memref<512x32xbf16, #tpu.memory_space<vmem>>, vector<512x32xbf16>
    %c0_1 = arith.constant 0 : index
    %c0_2 = arith.constant 0 : index
    %1 = vector.load %arg2[%c0_1, %c0_2] : memref<32x128xbf16, #tpu.memory_space<vmem>>, vector<32x128xbf16>
    %cst = arith.constant dense<0.000000e+00> : vector<512x128xf32>
    %2 = tpu.matmul %0, %1, %cst {dimension_numbers = #tpu.dot_dimension_numbers<[1], [0], [0], [1], [0, 0, 1, 1], [], []>} : vector<512x32xbf16>, vector<32x128xbf16>, vector<512x128xf32> -> vector<512x128xf32>
    %c0_3 = arith.constant 0 : index
    %c0_4 = arith.constant 0 : index
    %3 = vector.load %arg3[%c0_3, %c0_4] : memref<1x128xf32, #tpu.memory_space<vmem>>, vector<1x128xf32>
    %4 = vector.broadcast %3 : vector<1x128xf32> to vector<512x128xf32>
    %5 = arith.addf %2, %4 : vector<512x128xf32>
    %cst_5 = arith.constant 0.000000e+00 : f32
    %6 = vector.broadcast %cst_5 : f32 to vector<512x128xf32>
    %7 = arith.cmpf oge, %5, %6 : vector<512x128xf32>
    %cst_6 = arith.constant 2.000000e-01 : f32
    %8 = vector.broadcast %cst_6 : f32 to vector<512x128xf32>
    %9 = arith.mulf %8, %5 : vector<512x128xf32>
    %10 = arith.select %7, %5, %9 : vector<512x128xi1>, vector<512x128xf32>
    %11 = arith.truncf %10 : vector<512x128xf32> to vector<512x128xbf16>
    %c0_7 = arith.constant 0 : index
    %c0_8 = arith.constant 0 : index
    %12 = vector.load %arg4[%c0_7, %c0_8] : memref<512x128xbf16, #tpu.memory_space<vmem>>, vector<512x128xbf16>
    tpu.vector_store %arg4[%c0_7, %c0_8], %11 {strides = array<i32>} : memref<512x128xbf16, #tpu.memory_space<vmem>>, vector<512x128xbf16>,
    return
  }
  func.func @transform_0(%arg0: i32) -> (i32, i32) {
    %c0_i32 = arith.constant 0 : i32
    %c0_i32_0 = arith.constant 0 : i32
    return %arg0, %c0_i32 : i32, i32
  }
  func.func @transform_1(%arg0: i32) -> (i32, i32) {
    %c0_i32 = arith.constant 0 : i32
    %c0_i32_0 = arith.constant 0 : i32
    %c0_i32_1 = arith.constant 0 : i32
    return %c0_i32, %c0_i32_0 : i32, i32
  }
  func.func @transform_2(%arg0: i32) -> (i32, i32) {
    %c0_i32 = arith.constant 0 : i32
    %c0_i32_0 = arith.constant 0 : i32
    %c0_i32_1 = arith.constant 0 : i32
    return %c0_i32, %c0_i32_0 : i32, i32
  }
  func.func @transform_3(%arg0: i32) -> (i32, i32) {
    %c0_i32 = arith.constant 0 : i32
    %c0_i32_0 = arith.constant 0 : i32
    return %arg0, %c0_i32 : i32, i32
  }
}

</mosaic_0001>

<llo_original>
// kernel: tpu_custom_call.1
$region0: #{tpu_custom_call.1}
  #allocation0 [shape = 'u32[]', space=smem, size = 0x4, offset = 0x4, fixed_abs, tag = 'smem constant byte address 0x4 - core index']
  #allocation1 [shape = 'u32[144,128]{1,0:T(1,128)}', space=vmem, size = 0x12000, scoped, tag = 'internal scratch']
  %s0 = inlined_call_operand.vmem [shape: bf16[512,32], index: 0, kind: input, shape index: {}]
  %s1 = inlined_call_operand.vmem [shape: bf16[32,128], index: 1, kind: input, shape index: {}]
  %s2 = inlined_call_operand.vmem [shape: f32[1,128], index: 2, kind: input, shape index: {}]
  %s3 = inlined_call_operand.hbm [shape: bf16[512,128], index: 3, kind: output, shape index: {}]
  %s4 = sld [smem:[#allocation0]]
  $region22: #{tpu_custom_call.1} parent=0
    _
  %s6 = ssub.s32 1, %s4
  %s7 = scalar_select 0, %s6, %s4
  $region1: #{tpu_custom_call.1} parent=0
    #allocation2 [shape = 'u8[131072]{0}', space=vmem, size = 0x20000, scoped, tag = 'output window, operand 0, single buffered']
    #allocation3 [shape = 's32[1]{0}', space=sflag, size = 0x4, scoped, tag = 'scoped memory for tpu_custom_call.1']
    %8 = vsyncpa [#allocation3], 0
    // Predicated region
    $region2: #{tpu_custom_call.1} parent=1 // pred_check
      _
    $region3: #{tpu_custom_call.1} parent=1 // pred_check_branch
      %10 = sbr.rel (0) target = $region5
    $region4: #{tpu_custom_call.1} parent=1 // pred_region
      _
    $region5: #{tpu_custom_call.1} parent=1 // pred_fallthru
      _
    // Predicated region
    $region6: #{tpu_custom_call.1} parent=1 // pred_check
      _
    $region7: #{tpu_custom_call.1} parent=1 // pred_check_branch
      %12 = sbr.rel (0) target = $region9
    $region8: #{tpu_custom_call.1} parent=1 // pred_region
      _
    $region9: #{tpu_custom_call.1} parent=1 // pred_fallthru
      _
    // Predicated region
    $region10: #{tpu_custom_call.1} parent=1 // pred_check
      _
    $region11: #{tpu_custom_call.1} parent=1 // pred_check_branch
      %14 = sbr.rel (0) target = $region13
    $region12: #{tpu_custom_call.1} parent=1 // pred_region
      _
    $region13: #{tpu_custom_call.1} parent=1 // pred_fallthru
      _
    %v16 = vld [vmem:[%s0] sm:$0xf]
    %v17 = vld [vmem:[%s0 + $0x4] sm:$0xf]
    %v18 = vld [vmem:[%s0 + $0x8] sm:$0xf]
    %v19 = vld [vmem:[%s0 + $0xc] sm:$0xf]
    %v20 = vld [vmem:[%s0 + $0x10] sm:$0xf]
    %v21 = vld [vmem:[%s0 + $0x14] sm:$0xf]
    %v22 = vld [vmem:[%s0 + $0x18] sm:$0xf]
    %v23 = vld [vmem:[%s0 + $0x1c] sm:$0xf]
    %v24 = vld [vmem:[%s0 + $0x20] sm:$0xf]
    %v25 = vld [vmem:[%s0 + $0x24] sm:$0xf]
    %v26 = vld [vmem:[%s0 + $0x28] sm:$0xf]
    %v27 = vld [vmem:[%s0 + $0x2c] sm:$0xf]
    %v28 = vld [vmem:[%s0 + $0x30] sm:$0xf]
    %v29 = vld [vmem:[%s0 + $0x34] sm:$0xf]
    %v30 = vld [vmem:[%s0 + $0x38] sm:$0xf]
    %v31 = vld [vmem:[%s0 + $0x3c] sm:$0xf]
    %v32 = vld [vmem:[%s0 + $0x40] sm:$0xf]
    %v33 = vld [vmem:[%s0 + $0x44] sm:$0xf]
    %v34 = vld [vmem:[%s0 + $0x48] sm:$0xf]
    %v35 = vld [vmem:[%s0 + $0x4c] sm:$0xf]
    %v36 = vld [vmem:[%s0 + $0x50] sm:$0xf]
    %v37 = vld [vmem:[%s0 + $0x54] sm:$0xf]
    %v38 = vld [vmem:[%s0 + $0x58] sm:$0xf]
    %v39 = vld [vmem:[%s0 + $0x5c] sm:$0xf]
    %v40 = vld [vmem:[%s0 + $0x60] sm:$0xf]
    %v41 = vld [vmem:[%s0 + $0x64] sm:$0xf]
    %v42 = vld [vmem:[%s0 + $0x68] sm:$0xf]
    %v43 = vld [vmem:[%s0 + $0x6c] sm:$0xf]
    %v44 = vld [vmem:[%s0 + $0x70] sm:$0xf]
    %v45 = vld [vmem:[%s0 + $0x74] sm:$0xf]
    %v46 = vld [vmem:[%s0 + $0x78] sm:$0xf]
    %v47 = vld [vmem:[%s0 + $0x7c] sm:$0xf]
    %v48 = vld [vmem:[%s0 + $0x80] sm:$0xf]
    %v49 = vld [vmem:[%s0 + $0x84] sm:$0xf]
    %v50 = vld [vmem:[%s0 + $0x88] sm:$0xf]
    %v51 = vld [vmem:[%s0 + $0x8c] sm:$0xf]
    %v52 = vld [vmem:[%s0 + $0x90] sm:$0xf]
    %v53 = vld [vmem:[%s0 + $0x94] sm:$0xf]
    %v54 = vld [vmem:[%s0 + $0x98] sm:$0xf]
    %v55 = vld [vmem:[%s0 + $0x9c] sm:$0xf]
    %v56 = vld [vmem:[%s0 + $0xa0] sm:$0xf]
    %v57 = vld [vmem:[%s0 + $0xa4] sm:$0xf]
    %v58 = vld [vmem:[%s0 + $0xa8] sm:$0xf]
    %v59 = vld [vmem:[%s0 + $0xac] sm:$0xf]
    %v60 = vld [vmem:[%s0 + $0xb0] sm:$0xf]
    %v61 = vld [vmem:[%s0 + $0xb4] sm:$0xf]
    %v62 = vld [vmem:[%s0 + $0xb8] sm:$0xf]
    %v63 = vld [vmem:[%s0 + $0xbc] sm:$0xf]
    %v64 = vld [vmem:[%s0 + $0xc0] sm:$0xf]
    %v65 = vld [vmem:[%s0 + $0xc4] sm:$0xf]
    %v66 = vld [vmem:[%s0 + $0xc8] sm:$0xf]
    %v67 = vld [vmem:[%s0 + $0xcc] sm:$0xf]
    %v68 = vld [vmem:[%s0 + $0xd0] sm:$0xf]
    %v69 = vld [vmem:[%s0 + $0xd4] sm:$0xf]
    %v70 = vld [vmem:[%s0 + $0xd8] sm:$0xf]
    %v71 = vld [vmem:[%s0 + $0xdc] sm:$0xf]
    %v72 = vld [vmem:[%s0 + $0xe0] sm:$0xf]
    %v73 = vld [vmem:[%s0 + $0xe4] sm:$0xf]
    %v74 = vld [vmem:[%s0 + $0xe8] sm:$0xf]
    %v75 = vld [vmem:[%s0 + $0xec] sm:$0xf]
    %v76 = vld [vmem:[%s0 + $0xf0] sm:$0xf]
    %v77 = vld [vmem:[%s0 + $0xf4] sm:$0xf]
    %v78 = vld [vmem:[%s0 + $0xf8] sm:$0xf]
    %v79 = vld [vmem:[%s0 + $0xfc] sm:$0xf]
    %v80 = vld [vmem:[%s1] sm:$0xf]
    %v81 = vld [vmem:[%s1 + $0x4] sm:$0xf]
    %v82 = vld [vmem:[%s1 + $0x8] sm:$0xf]
    %v83 = vld [vmem:[%s1 + $0xc] sm:$0xf]
    %v84 = vld [vmem:[%s2] sm:$0x1]
    %v86 = vlaneseq
    %v87 = vshrl.u32 %v86, 7
    %v88 = vsub.s32 0, %v87
    %v89 = vrot.slane %v84, %v88
    %v155 = vunpack.c.l.b16 %v16
    %v156 = vunpack.c.l.b16 %v17
    %v157 = vunpack.c.l.b16 %v18
    %v158 = vunpack.c.l.b16 %v19
    %v159 = vunpack.c.l.b16 %v20
    %v160 = vunpack.c.l.b16 %v21
    %v161 = vunpack.c.l.b16 %v22
    %v162 = vunpack.c.l.b16 %v23
    %v163 = vunpack.c.l.b16 %v24
    %v164 = vunpack.c.l.b16 %v25
    %v165 = vunpack.c.l.b16 %v26
    %v166 = vunpack.c.l.b16 %v27
    %v167 = vunpack.c.l.b16 %v28
    %v168 = vunpack.c.l.b16 %v29
    %v169 = vunpack.c.l.b16 %v30
    %v170 = vunpack.c.l.b16 %v31
    %v171 = vunpack.c.l.b16 %v32
    %v172 = vunpack.c.l.b16 %v33
    %v173 = vunpack.c.l.b16 %v34
    %v174 = vunpack.c.l.b16 %v35
    %v175 = vunpack.c.l.b16 %v36
    %v176 = vunpack.c.l.b16 %v37
    %v177 = vunpack.c.l.b16 %v38
    %v178 = vunpack.c.l.b16 %v39
    %v179 = vunpack.c.l.b16 %v40
    %v180 = vunpack.c.l.b16 %v41
    %v181 = vunpack.c.l.b16 %v42
    %v182 = vunpack.c.l.b16 %v43
    %v183 = vunpack.c.l.b16 %v44
    %v184 = vunpack.c.l.b16 %v45
    %v185 = vunpack.c.l.b16 %v46
    %v186 = vunpack.c.l.b16 %v47
    %v187 = vunpack.c.l.b16 %v48
    %v188 = vunpack.c.l.b16 %v49
    %v189 = vunpack.c.l.b16 %v50
    %v190 = vunpack.c.l.b16 %v51
    %v191 = vunpack.c.l.b16 %v52
    %v192 = vunpack.c.l.b16 %v53
    %v193 = vunpack.c.l.b16 %v54
    %v194 = vunpack.c.l.b16 %v55
    %v195 = vunpack.c.l.b16 %v56
    %v196 = vunpack.c.l.b16 %v57
    %v197 = vunpack.c.l.b16 %v58
    %v198 = vunpack.c.l.b16 %v59
    %v199 = vunpack.c.l.b16 %v60
    %v200 = vunpack.c.l.b16 %v61
    %v201 = vunpack.c.l.b16 %v62
    %v202 = vunpack.c.l.b16 %v63
    %v203 = vunpack.c.l.b16 %v64
    %v204 = vunpack.c.l.b16 %v65
    %v205 = vunpack.c.l.b16 %v66
    %v206 = vunpack.c.l.b16 %v67
    %v207 = vunpack.c.l.b16 %v68
    %v208 = vunpack.c.l.b16 %v69
    %v209 = vunpack.c.l.b16 %v70
    %v210 = vunpack.c.l.b16 %v71
    %v211 = vunpack.c.l.b16 %v72
    %v212 = vunpack.c.l.b16 %v73
    %v213 = vunpack.c.l.b16 %v74
    %v214 = vunpack.c.l.b16 %v75
    %v215 = vunpack.c.l.b16 %v76
    %v216 = vunpack.c.l.b16 %v77
    %v217 = vunpack.c.l.b16 %v78
    %v218 = vunpack.c.l.b16 %v79
    %v219 = vpack.c.b16 %v156, %v155
    %v220 = vpack.c.b16 %v158, %v157
    %v221 = vpack.c.b16 %v160, %v159
    %v222 = vpack.c.b16 %v162, %v161
    %v223 = vpack.c.b16 %v164, %v163
    %v224 = vpack.c.b16 %v166, %v165
    %v225 = vpack.c.b16 %v168, %v167
    %v226 = vpack.c.b16 %v170, %v169
    %v227 = vpack.c.b16 %v172, %v171
    %v228 = vpack.c.b16 %v174, %v173
    %v229 = vpack.c.b16 %v176, %v175
    %v230 = vpack.c.b16 %v178, %v177
    %v231 = vpack.c.b16 %v180, %v179
    %v232 = vpack.c.b16 %v182, %v181
    %v233 = vpack.c.b16 %v184, %v183
    %v234 = vpack.c.b16 %v186, %v185
    %v235 = vpack.c.b16 %v188, %v187
    %v236 = vpack.c.b16 %v190, %v189
    %v237 = vpack.c.b16 %v192, %v191
    %v238 = vpack.c.b16 %v194, %v193
    %v239 = vpack.c.b16 %v196, %v195
    %v240 = vpack.c.b16 %v198, %v197
    %v241 = vpack.c.b16 %v200, %v199
    %v242 = vpack.c.b16 %v202, %v201
    %v243 = vpack.c.b16 %v204, %v203
    %v244 = vpack.c.b16 %v206, %v205
    %v245 = vpack.c.b16 %v208, %v207
    %v246 = vpack.c.b16 %v210, %v209
    %v247 = vpack.c.b16 %v212, %v211
    %v248 = vpack.c.b16 %v214, %v213
    %v249 = vpack.c.b16 %v216, %v215
    %v250 = vpack.c.b16 %v218, %v217
    %v255 = vunpack.c.l.b16 %v80
    %v256 = vunpack.c.l.b16 %v81
    %v257 = vunpack.c.l.b16 %v82
    %v258 = vunpack.c.l.b16 %v83
    %v259 = vpack.c.b16 %v256, %v255
    %v260 = vpack.c.b16 %v258, %v257
    %vm263 = vcmask 261120
    %v265 = vsel %vm263, %v219, 0
    %v268 = vsel %vm263, %v220, 0
    %v271 = vsel %vm263, %v221, 0
    %v274 = vsel %vm263, %v222, 0
    %v277 = vsel %vm263, %v223, 0
    %v280 = vsel %vm263, %v224, 0
    %v283 = vsel %vm263, %v225, 0
    %v286 = vsel %vm263, %v226, 0
    %v289 = vsel %vm263, %v227, 0
    %v292 = vsel %vm263, %v228, 0
    %v295 = vsel %vm263, %v229, 0
    %v298 = vsel %vm263, %v230, 0
    %v301 = vsel %vm263, %v231, 0
    %v304 = vsel %vm263, %v232, 0
    %v307 = vsel %vm263, %v233, 0
    %v310 = vsel %vm263, %v234, 0
    %v313 = vsel %vm263, %v235, 0
    %v316 = vsel %vm263, %v236, 0
    %v319 = vsel %vm263, %v237, 0
    %v322 = vsel %vm263, %v238, 0
    %v325 = vsel %vm263, %v239, 0
    %v328 = vsel %vm263, %v240, 0
    %v331 = vsel %vm263, %v241, 0
    %v334 = vsel %vm263, %v242, 0
    %v337 = vsel %vm263, %v243, 0
    %v340 = vsel %vm263, %v244, 0
    %v343 = vsel %vm263, %v245, 0
    %v346 = vsel %vm263, %v246, 0
    %v349 = vsel %vm263, %v247, 0
    %v352 = vsel %vm263, %v248, 0
    %v355 = vsel %vm263, %v249, 0
    %v358 = vsel %vm263, %v250, 0
    %360 = vmatprep.subr.bf16.mxu0 0
    %361 = vmatpush1.bf16.msra.mxu0 %v259
    %362 = vmatprep.subr.bf16.mxu0 0
    %363 = vmatpush1.bf16.msra.mxu0 %v260
    %364 = vmatprep.subr.bf16.mxu0 0
    %365 = vmatpush1.bf16.msra.mxu0 0
    %366 = vmatprep.subr.bf16.mxu0 0
    %367 = vmatpush1.bf16.msra.mxu0 0
    %368 = vmatprep.subr.bf16.mxu0 0
    %369 = vmatpush1.bf16.msra.mxu0 0
    %370 = vmatprep.subr.bf16.mxu0 0
    %371 = vmatpush1.bf16.msra.mxu0 0
    %372 = vmatprep.subr.bf16.mxu0 0
    %373 = vmatpush1.bf16.msra.mxu0 0
    %374 = vmatprep.subr.bf16.mxu0 0
    %375 = vmatpush1.bf16.msra.mxu0 0
    %376 = vmatprep.subr.bf16.mxu0 0
    %377 = vmatpush1.bf16.msra.mxu0 0
    %378 = vmatprep.subr.bf16.mxu0 0
    %379 = vmatpush1.bf16.msra.mxu0 0
    %380 = vmatprep.subr.bf16.mxu0 0
    %381 = vmatpush1.bf16.msra.mxu0 0
    %382 = vmatprep.subr.bf16.mxu0 0
    %383 = vmatpush1.bf16.msra.mxu0 0
    %384 = vmatprep.subr.bf16.mxu0 0
    %385 = vmatpush1.bf16.msra.mxu0 0
    %386 = vmatprep.subr.bf16.mxu0 0
    %387 = vmatpush1.bf16.msra.mxu0 0
    %388 = vmatprep.subr.bf16.mxu0 0
    %389 = vmatpush1.bf16.msra.mxu0 0
    %390 = vmatprep.subr.bf16.mxu0 0
    %391 = vmatpush1.bf16.msra.mxu0 0
    %392 = vmatprep.mubr.bf16.mxu0 0
    %393 = vmatmul.mubr.bf16.gmra.mrb[0].mxu0 %v265
    %v394 = vpop.f32.mrb[0].mxu0
    %v395 = vadd.f32 %v89, %v394
    %v396 = vpop.f32.mrb[0].mxu0
    %v397 = vpop.f32.mrb[0].mxu0
    %v398 = vadd.f32 %v89, %v397
    %v399 = vpop.f32.mrb[0].mxu0
    %400 = vmatprep.mubr.bf16.mxu0 0
    %401 = vmatmul.mubr.bf16.gmra.mrb[0].mxu0 %v268
    %v402 = vpop.f32.mrb[0].mxu0
    %v403 = vadd.f32 %v89, %v402
    %v404 = vpop.f32.mrb[0].mxu0
    %v405 = vpop.f32.mrb[0].mxu0
    %v406 = vadd.f32 %v89, %v405
    %v407 = vpop.f32.mrb[0].mxu0
    %408 = vmatprep.mubr.bf16.mxu0 0
    %409 = vmatmul.mubr.bf16.gmra.mrb[0].mxu0 %v271
    %v410 = vpop.f32.mrb[0].mxu0
    %v411 = vadd.f32 %v89, %v410
    %v412 = vpop.f32.mrb[0].mxu0
    %v413 = vpop.f32.mrb[0].mxu0
    %v414 = vadd.f32 %v89, %v413
    %v415 = vpop.f32.mrb[0].mxu0
    %416 = vmatprep.mubr.bf16.mxu0 0
    %417 = vmatmul.mubr.bf16.gmra.mrb[0].mxu0 %v274
    %v418 = vpop.f32.mrb[0].mxu0
    %v419 = vadd.f32 %v89, %v418
    %v420 = vpop.f32.mrb[0].mxu0
    %v421 = vpop.f32.mrb[0].mxu0
    %v422 = vadd.f32 %v89, %v421
    %v423 = vpop.f32.mrb[0].mxu0
    %424 = vmatprep.mubr.bf16.mxu0 0
    %425 = vmatmul.mubr.bf16.gmra.mrb[0].mxu0 %v277
    %v426 = vpop.f32.mrb[0].mxu0
    %v427 = vadd.f32 %v89, %v426
    %v428 = vpop.f32.mrb[0].mxu0
    %v429 = vpop.f32.mrb[0].mxu0
    %v430 = vadd.f32 %v89, %v429
    %v431 = vpop.f32.mrb[0].mxu0
    %432 = vmatprep.mubr.bf16.mxu0 0
    %433 = vmatmul.mubr.bf16.gmra.mrb[0].mxu0 %v280
    %v434 = vpop.f32.mrb[0].mxu0
    %v435 = vadd.f32 %v89, %v434
    %v436 = vpop.f32.mrb[0].mxu0
    %v437 = vpop.f32.mrb[0].mxu0
    %v438 = vadd.f32 %v89, %v437
    %v439 = vpop.f32.mrb[0].mxu0
    %440 = vmatprep.mubr.bf16.mxu0 0
    %441 = vmatmul.mubr.bf16.gmra.mrb[0].mxu0 %v283
    %v442 = vpop.f32.mrb[0].mxu0
    %v443 = vadd.f32 %v89, %v442
    %v444 = vpop.f32.mrb[0].mxu0
    %v445 = vpop.f32.mrb[0].mxu0
    %v446 = vadd.f32 %v89, %v445
    %v447 = vpop.f32.mrb[0].mxu0
    %448 = vmatprep.mubr.bf16.mxu0 0
    %449 = vmatmul.mubr.bf16.gmra.mrb[0].mxu0 %v286
    %v450 = vpop.f32.mrb[0].mxu0
    %v451 = vadd.f32 %v89, %v450
    %v452 = vpop.f32.mrb[0].mxu0
    %v453 = vpop.f32.mrb[0].mxu0
    %v454 = vadd.f32 %v89, %v453
    %v455 = vpop.f32.mrb[0].mxu0
    %456 = vmatprep.mubr.bf16.mxu0 0
    %457 = vmatmul.mubr.bf16.gmra.mrb[0].mxu0 %v289
    %v458 = vpop.f32.mrb[0].mxu0
    %v459 = vadd.f32 %v89, %v458
    %v460 = vpop.f32.mrb[0].mxu0
    %v461 = vpop.f32.mrb[0].mxu0
    %v462 = vadd.f32 %v89, %v461
    %v463 = vpop.f32.mrb[0].mxu0
    %464 = vmatprep.mubr.bf16.mxu0 0
    %465 = vmatmul.mubr.bf16.gmra.mrb[0].mxu0 %v292
    %v466 = vpop.f32.mrb[0].mxu0
    %v467 = vadd.f32 %v89, %v466
    %v468 = vpop.f32.mrb[0].mxu0
    %v469 = vpop.f32.mrb[0].mxu0
    %v470 = vadd.f32 %v89, %v469
    %v471 = vpop.f32.mrb[0].mxu0
    %472 = vmatprep.mubr.bf16.mxu0 0
    %473 = vmatmul.mubr.bf16.gmra.mrb[0].mxu0 %v295
    %v474 = vpop.f32.mrb[0].mxu0
    %v475 = vadd.f32 %v89, %v474
    %v476 = vpop.f32.mrb[0].mxu0
    %v477 = vpop.f32.mrb[0].mxu0
    %v478 = vadd.f32 %v89, %v477
    %v479 = vpop.f32.mrb[0].mxu0
    %480 = vmatprep.mubr.bf16.mxu0 0
    %481 = vmatmul.mubr.bf16.gmra.mrb[0].mxu0 %v298
    %v482 = vpop.f32.mrb[0].mxu0
    %v483 = vadd.f32 %v89, %v482
    %v484 = vpop.f32.mrb[0].mxu0
    %v485 = vpop.f32.mrb[0].mxu0
    %v486 = vadd.f32 %v89, %v485
    %v487 = vpop.f32.mrb[0].mxu0
    %488 = vmatprep.mubr.bf16.mxu0 0
    %489 = vmatmul.mubr.bf16.gmra.mrb[0].mxu0 %v301
    %v490 = vpop.f32.mrb[0].mxu0
    %v491 = vadd.f32 %v89, %v490
    %v492 = vpop.f32.mrb[0].mxu0
    %v493 = vpop.f32.mrb[0].mxu0
    %v494 = vadd.f32 %v89, %v493
    %v495 = vpop.f32.mrb[0].mxu0
    %496 = vmatprep.mubr.bf16.mxu0 0
    %497 = vmatmul.mubr.bf16.gmra.mrb[0].mxu0 %v304
    %v498 = vpop.f32.mrb[0].mxu0
    %v499 = vadd.f32 %v89, %v498
    %v500 = vpop.f32.mrb[0].mxu0
    %v501 = vpop.f32.mrb[0].mxu0
    %v502 = vadd.f32 %v89, %v501
    %v503 = vpop.f32.mrb[0].mxu0
    %504 = vmatprep.mubr.bf16.mxu0 0
    %505 = vmatmul.mubr.bf16.gmra.mrb[0].mxu0 %v307
    %v506 = vpop.f32.mrb[0].mxu0
    %v507 = vadd.f32 %v89, %v506
    %v508 = vpop.f32.mrb[0].mxu0
    %v509 = vpop.f32.mrb[0].mxu0
    %v510 = vadd.f32 %v89, %v509
    %v511 = vpop.f32.mrb[0].mxu0
    %512 = vmatprep.mubr.bf16.mxu0 0
    %513 = vmatmul.mubr.bf16.gmra.mrb[0].mxu0 %v310
    %v514 = vpop.f32.mrb[0].mxu0
    %v515 = vadd.f32 %v89, %v514
    %v516 = vpop.f32.mrb[0].mxu0
    %v517 = vpop.f32.mrb[0].mxu0
    %v518 = vadd.f32 %v89, %v517
    %v519 = vpop.f32.mrb[0].mxu0
    %520 = vmatprep.mubr.bf16.mxu0 0
    %521 = vmatmul.mubr.bf16.gmra.mrb[0].mxu0 %v313
    %v522 = vpop.f32.mrb[0].mxu0
    %v523 = vadd.f32 %v89, %v522
    %v524 = vpop.f32.mrb[0].mxu0
    %v525 = vpop.f32.mrb[0].mxu0
    %v526 = vadd.f32 %v89, %v525
    %v527 = vpop.f32.mrb[0].mxu0
    %528 = vmatprep.mubr.bf16.mxu0 0
    %529 = vmatmul.mubr.bf16.gmra.mrb[0].mxu0 %v316
    %v530 = vpop.f32.mrb[0].mxu0
    %v531 = vadd.f32 %v89, %v530
    %v532 = vpop.f32.mrb[0].mxu0
    %v533 = vpop.f32.mrb[0].mxu0
    %v534 = vadd.f32 %v89, %v533
    %v535 = vpop.f32.mrb[0].mxu0
    %536 = vmatprep.mubr.bf16.mxu0 0
    %537 = vmatmul.mubr.bf16.gmra.mrb[0].mxu0 %v319
    %v538 = vpop.f32.mrb[0].mxu0
    %v539 = vadd.f32 %v89, %v538
    %v540 = vpop.f32.mrb[0].mxu0
    %v541 = vpop.f32.mrb[0].mxu0
    %v542 = vadd.f32 %v89, %v541
    %v543 = vpop.f32.mrb[0].mxu0
    %544 = vmatprep.mubr.bf16.mxu0 0
    %545 = vmatmul.mubr.bf16.gmra.mrb[0].mxu0 %v322
    %v546 = vpop.f32.mrb[0].mxu0
    %v547 = vadd.f32 %v89, %v546
    %v548 = vpop.f32.mrb[0].mxu0
    %v549 = vpop.f32.mrb[0].mxu0
    %v550 = vadd.f32 %v89, %v549
    %v551 = vpop.f32.mrb[0].mxu0
    %552 = vmatprep.mubr.bf16.mxu0 0
    %553 = vmatmul.mubr.bf16.gmra.mrb[0].mxu0 %v325
    %v554 = vpop.f32.mrb[0].mxu0
    %v555 = vadd.f32 %v89, %v554
    %v556 = vpop.f32.mrb[0].mxu0
    %v557 = vpop.f32.mrb[0].mxu0
    %v558 = vadd.f32 %v89, %v557
    %v559 = vpop.f32.mrb[0].mxu0
    %560 = vmatprep.mubr.bf16.mxu0 0
    %561 = vmatmul.mubr.bf16.gmra.mrb[0].mxu0 %v328
    %v562 = vpop.f32.mrb[0].mxu0
    %v563 = vadd.f32 %v89, %v562
    %v564 = vpop.f32.mrb[0].mxu0
    %v565 = vpop.f32.mrb[0].mxu0
    %v566 = vadd.f32 %v89, %v565
    %v567 = vpop.f32.mrb[0].mxu0
    %568 = vmatprep.mubr.bf16.mxu0 0
    %569 = vmatmul.mubr.bf16.gmra.mrb[0].mxu0 %v331
    %v570 = vpop.f32.mrb[0].mxu0
    %v571 = vadd.f32 %v89, %v570
    %v572 = vpop.f32.mrb[0].mxu0
    %v573 = vpop.f32.mrb[0].mxu0
    %v574 = vadd.f32 %v89, %v573
    %v575 = vpop.f32.mrb[0].mxu0
    %576 = vmatprep.mubr.bf16.mxu0 0
    %577 = vmatmul.mubr.bf16.gmra.mrb[0].mxu0 %v334
    %v578 = vpop.f32.mrb[0].mxu0
    %v579 = vadd.f32 %v89, %v578
    %v580 = vpop.f32.mrb[0].mxu0
    %v581 = vpop.f32.mrb[0].mxu0
    %v582 = vadd.f32 %v89, %v581
    %v583 = vpop.f32.mrb[0].mxu0
    %584 = vmatprep.mubr.bf16.mxu0 0
    %585 = vmatmul.mubr.bf16.gmra.mrb[0].mxu0 %v337
    %v586 = vpop.f32.mrb[0].mxu0
    %v587 = vadd.f32 %v89, %v586
    %v588 = vpop.f32.mrb[0].mxu0
    %v589 = vpop.f32.mrb[0].mxu0
    %v590 = vadd.f32 %v89, %v589
    %v591 = vpop.f32.mrb[0].mxu0
    %592 = vmatprep.mubr.bf16.mxu0 0
    %593 = vmatmul.mubr.bf16.gmra.mrb[0].mxu0 %v340
    %v594 = vpop.f32.mrb[0].mxu0
    %v595 = vadd.f32 %v89, %v594
    %v596 = vpop.f32.mrb[0].mxu0
    %v597 = vpop.f32.mrb[0].mxu0
    %v598 = vadd.f32 %v89, %v597
    %v599 = vpop.f32.mrb[0].mxu0
    %600 = vmatprep.mubr.bf16.mxu0 0
    %601 = vmatmul.mubr.bf16.gmra.mrb[0].mxu0 %v343
    %v602 = vpop.f32.mrb[0].mxu0
    %v603 = vadd.f32 %v89, %v602
    %v604 = vpop.f32.mrb[0].mxu0
    %v605 = vpop.f32.mrb[0].mxu0
    %v606 = vadd.f32 %v89, %v605
    %v607 = vpop.f32.mrb[0].mxu0
    %608 = vmatprep.mubr.bf16.mxu0 0
    %609 = vmatmul.mubr.bf16.gmra.mrb[0].mxu0 %v346
    %v610 = vpop.f32.mrb[0].mxu0
    %v611 = vadd.f32 %v89, %v610
    %v612 = vpop.f32.mrb[0].mxu0
    %v613 = vpop.f32.mrb[0].mxu0
    %v614 = vadd.f32 %v89, %v613
    %v615 = vpop.f32.mrb[0].mxu0
    %616 = vmatprep.mubr.bf16.mxu0 0
    %617 = vmatmul.mubr.bf16.gmra.mrb[0].mxu0 %v349
    %v618 = vpop.f32.mrb[0].mxu0
    %v619 = vadd.f32 %v89, %v618
    %v620 = vpop.f32.mrb[0].mxu0
    %v621 = vpop.f32.mrb[0].mxu0
    %v622 = vadd.f32 %v89, %v621
    %v623 = vpop.f32.mrb[0].mxu0
    %624 = vmatprep.mubr.bf16.mxu0 0
    %625 = vmatmul.mubr.bf16.gmra.mrb[0].mxu0 %v352
    %v626 = vpop.f32.mrb[0].mxu0
    %v627 = vadd.f32 %v89, %v626
    %v628 = vpop.f32.mrb[0].mxu0
    %v629 = vpop.f32.mrb[0].mxu0
    %v630 = vadd.f32 %v89, %v629
    %v631 = vpop.f32.mrb[0].mxu0
    %632 = vmatprep.mubr.bf16.mxu0 0
    %633 = vmatmul.mubr.bf16.gmra.mrb[0].mxu0 %v355
    %v634 = vpop.f32.mrb[0].mxu0
    %v635 = vadd.f32 %v89, %v634
    %v636 = vpop.f32.mrb[0].mxu0
    %v637 = vpop.f32.mrb[0].mxu0
    %v638 = vadd.f32 %v89, %v637
    %v639 = vpop.f32.mrb[0].mxu0
    %640 = vmatprep.mubr.bf16.mxu0 0
    %641 = vmatmul.mubr.bf16.gmra.mrb[0].mxu0 %v358
    %v642 = vpop.f32.mrb[0].mxu0
    %v643 = vadd.f32 %v89, %v642
    %v644 = vpop.f32.mrb[0].mxu0
    %v645 = vpop.f32.mrb[0].mxu0
    %v646 = vadd.f32 %v89, %v645
    %v647 = vpop.f32.mrb[0].mxu0
    %648 = vdwg.mxu0
    %vm649 = vcmp.ge.f32.partialorder %v395, 0.0
    %vm650 = vcmp.ge.f32.partialorder %v398, 0.0
    %vm651 = vcmp.ge.f32.partialorder %v403, 0.0
    %vm652 = vcmp.ge.f32.partialorder %v406, 0.0
    %vm653 = vcmp.ge.f32.partialorder %v411, 0.0
    %vm654 = vcmp.ge.f32.partialorder %v414, 0.0
    %vm655 = vcmp.ge.f32.partialorder %v419, 0.0
    %vm656 = vcmp.ge.f32.partialorder %v422, 0.0
    %vm657 = vcmp.ge.f32.partialorder %v427, 0.0
    %vm658 = vcmp.ge.f32.partialorder %v430, 0.0
    %vm659 = vcmp.ge.f32.partialorder %v435, 0.0
    %vm660 = vcmp.ge.f32.partialorder %v438, 0.0
    %vm661 = vcmp.ge.f32.partialorder %v443, 0.0
    %vm662 = vcmp.ge.f32.partialorder %v446, 0.0
    %vm663 = vcmp.ge.f32.partialorder %v451, 0.0
    %vm664 = vcmp.ge.f32.partialorder %v454, 0.0
    %vm665 = vcmp.ge.f32.partialorder %v459, 0.0
    %vm666 = vcmp.ge.f32.partialorder %v462, 0.0
    %vm667 = vcmp.ge.f32.partialorder %v467, 0.0
    %vm668 = vcmp.ge.f32.partialorder %v470, 0.0
    %vm669 = vcmp.ge.f32.partialorder %v475, 0.0
    %vm670 = vcmp.ge.f32.partialorder %v478, 0.0
    %vm671 = vcmp.ge.f32.partialorder %v483, 0.0
    %vm672 = vcmp.ge.f32.partialorder %v486, 0.0
    %vm673 = vcmp.ge.f32.partialorder %v491, 0.0
    %vm674 = vcmp.ge.f32.partialorder %v494, 0.0
    %vm675 = vcmp.ge.f32.partialorder %v499, 0.0
    %vm676 = vcmp.ge.f32.partialorder %v502, 0.0
    %vm677 = vcmp.ge.f32.partialorder %v507, 0.0
    %vm678 = vcmp.ge.f32.partialorder %v510, 0.0
    %vm679 = vcmp.ge.f32.partialorder %v515, 0.0
    %vm680 = vcmp.ge.f32.partialorder %v518, 0.0
    %vm681 = vcmp.ge.f32.partialorder %v523, 0.0
    %vm682 = vcmp.ge.f32.partialorder %v526, 0.0
    %vm683 = vcmp.ge.f32.partialorder %v531, 0.0
    %vm684 = vcmp.ge.f32.partialorder %v534, 0.0
    %vm685 = vcmp.ge.f32.partialorder %v539, 0.0
    %vm686 = vcmp.ge.f32.partialorder %v542, 0.0
    %vm687 = vcmp.ge.f32.partialorder %v547, 0.0
    %vm688 = vcmp.ge.f32.partialorder %v550, 0.0
    %vm689 = vcmp.ge.f32.partialorder %v555, 0.0
    %vm690 = vcmp.ge.f32.partialorder %v558, 0.0
    %vm691 = vcmp.ge.f32.partialorder %v563, 0.0
    %vm692 = vcmp.ge.f32.partialorder %v566, 0.0
    %vm693 = vcmp.ge.f32.partialorder %v571, 0.0
    %vm694 = vcmp.ge.f32.partialorder %v574, 0.0
    %vm695 = vcmp.ge.f32.partialorder %v579, 0.0
    %vm696 = vcmp.ge.f32.partialorder %v582, 0.0
    %vm697 = vcmp.ge.f32.partialorder %v587, 0.0
    %vm698 = vcmp.ge.f32.partialorder %v590, 0.0
    %vm699 = vcmp.ge.f32.partialorder %v595, 0.0
    %vm700 = vcmp.ge.f32.partialorder %v598, 0.0
    %vm701 = vcmp.ge.f32.partialorder %v603, 0.0
    %vm702 = vcmp.ge.f32.partialorder %v606, 0.0
    %vm703 = vcmp.ge.f32.partialorder %v611, 0.0
    %vm704 = vcmp.ge.f32.partialorder %v614, 0.0
    %vm705 = vcmp.ge.f32.partialorder %v619, 0.0
    %vm706 = vcmp.ge.f32.partialorder %v622, 0.0
    %vm707 = vcmp.ge.f32.partialorder %v627, 0.0
    %vm708 = vcmp.ge.f32.partialorder %v630, 0.0
    %vm709 = vcmp.ge.f32.partialorder %v635, 0.0
    %vm710 = vcmp.ge.f32.partialorder %v638, 0.0
    %vm711 = vcmp.ge.f32.partialorder %v643, 0.0
    %vm712 = vcmp.ge.f32.partialorder %v646, 0.0
    %v713 = vmul.f32 %v395, 0.2
    %v714 = vmul.f32 %v398, 0.2
    %v715 = vmul.f32 %v403, 0.2
    %v716 = vmul.f32 %v406, 0.2
    %v717 = vmul.f32 %v411, 0.2
    %v718 = vmul.f32 %v414, 0.2
    %v719 = vmul.f32 %v419, 0.2
    %v720 = vmul.f32 %v422, 0.2
    %v721 = vmul.f32 %v427, 0.2
    %v722 = vmul.f32 %v430, 0.2
    %v723 = vmul.f32 %v435, 0.2
    %v724 = vmul.f32 %v438, 0.2
    %v725 = vmul.f32 %v443, 0.2
    %v726 = vmul.f32 %v446, 0.2
    %v727 = vmul.f32 %v451, 0.2
    %v728 = vmul.f32 %v454, 0.2
    %v729 = vmul.f32 %v459, 0.2
    %v730 = vmul.f32 %v462, 0.2
    %v731 = vmul.f32 %v467, 0.2
    %v732 = vmul.f32 %v470, 0.2
    %v733 = vmul.f32 %v475, 0.2
    %v734 = vmul.f32 %v478, 0.2
    %v735 = vmul.f32 %v483, 0.2
    %v736 = vmul.f32 %v486, 0.2
    %v737 = vmul.f32 %v491, 0.2
    %v738 = vmul.f32 %v494, 0.2
    %v739 = vmul.f32 %v499, 0.2
    %v740 = vmul.f32 %v502, 0.2
    %v741 = vmul.f32 %v507, 0.2
    %v742 = vmul.f32 %v510, 0.2
    %v743 = vmul.f32 %v515, 0.2
    %v744 = vmul.f32 %v518, 0.2
    %v745 = vmul.f32 %v523, 0.2
    %v746 = vmul.f32 %v526, 0.2
    %v747 = vmul.f32 %v531, 0.2
    %v748 = vmul.f32 %v534, 0.2
    %v749 = vmul.f32 %v539, 0.2
    %v750 = vmul.f32 %v542, 0.2
    %v751 = vmul.f32 %v547, 0.2
    %v752 = vmul.f32 %v550, 0.2
    %v753 = vmul.f32 %v555, 0.2
    %v754 = vmul.f32 %v558, 0.2
    %v755 = vmul.f32 %v563, 0.2
    %v756 = vmul.f32 %v566, 0.2
    %v757 = vmul.f32 %v571, 0.2
    %v758 = vmul.f32 %v574, 0.2
    %v759 = vmul.f32 %v579, 0.2
    %v760 = vmul.f32 %v582, 0.2
    %v761 = vmul.f32 %v587, 0.2
    %v762 = vmul.f32 %v590, 0.2
    %v763 = vmul.f32 %v595, 0.2
    %v764 = vmul.f32 %v598, 0.2
    %v765 = vmul.f32 %v603, 0.2
    %v766 = vmul.f32 %v606, 0.2
    %v767 = vmul.f32 %v611, 0.2
    %v768 = vmul.f32 %v614, 0.2
    %v769 = vmul.f32 %v619, 0.2
    %v770 = vmul.f32 %v622, 0.2
    %v771 = vmul.f32 %v627, 0.2
    %v772 = vmul.f32 %v630, 0.2
    %v773 = vmul.f32 %v635, 0.2
    %v774 = vmul.f32 %v638, 0.2
    %v775 = vmul.f32 %v643, 0.2
    %v776 = vmul.f32 %v646, 0.2
    %v777 = vsel %vm649, %v395, %v713
    %v778 = vsel %vm650, %v398, %v714
    %v779 = vsel %vm651, %v403, %v715
    %v780 = vsel %vm652, %v406, %v716
    %v781 = vsel %vm653, %v411, %v717
    %v782 = vsel %vm654, %v414, %v718
    %v783 = vsel %vm655, %v419, %v719
    %v784 = vsel %vm656, %v422, %v720
    %v785 = vsel %vm657, %v427, %v721
    %v786 = vsel %vm658, %v430, %v722
    %v787 = vsel %vm659, %v435, %v723
    %v788 = vsel %vm660, %v438, %v724
    %v789 = vsel %vm661, %v443, %v725
    %v790 = vsel %vm662, %v446, %v726
    %v791 = vsel %vm663, %v451, %v727
    %v792 = vsel %vm664, %v454, %v728
    %v793 = vsel %vm665, %v459, %v729
    %v794 = vsel %vm666, %v462, %v730
    %v795 = vsel %vm667, %v467, %v731
    %v796 = vsel %vm668, %v470, %v732
    %v797 = vsel %vm669, %v475, %v733
    %v798 = vsel %vm670, %v478, %v734
    %v799 = vsel %vm671, %v483, %v735
    %v800 = vsel %vm672, %v486, %v736
    %v801 = vsel %vm673, %v491, %v737
    %v802 = vsel %vm674, %v494, %v738
    %v803 = vsel %vm675, %v499, %v739
    %v804 = vsel %vm676, %v502, %v740
    %v805 = vsel %vm677, %v507, %v741
    %v806 = vsel %vm678, %v510, %v742
    %v807 = vsel %vm679, %v515, %v743
    %v808 = vsel %vm680, %v518, %v744
    %v809 = vsel %vm681, %v523, %v745
    %v810 = vsel %vm682, %v526, %v746
    %v811 = vsel %vm683, %v531, %v747
    %v812 = vsel %vm684, %v534, %v748
    %v813 = vsel %vm685, %v539, %v749
    %v814 = vsel %vm686, %v542, %v750
    %v815 = vsel %vm687, %v547, %v751
    %v816 = vsel %vm688, %v550, %v752
    %v817 = vsel %vm689, %v555, %v753
    %v818 = vsel %vm690, %v558, %v754
    %v819 = vsel %vm691, %v563, %v755
    %v820 = vsel %vm692, %v566, %v756
    %v821 = vsel %vm693, %v571, %v757
    %v822 = vsel %vm694, %v574, %v758
    %v823 = vsel %vm695, %v579, %v759
    %v824 = vsel %vm696, %v582, %v760
    %v825 = vsel %vm697, %v587, %v761
    %v826 = vsel %vm698, %v590, %v762
    %v827 = vsel %vm699, %v595, %v763
    %v828 = vsel %vm700, %v598, %v764
    %v829 = vsel %vm701, %v603, %v765
    %v830 = vsel %vm702, %v606, %v766
    %v831 = vsel %vm703, %v611, %v767
    %v832 = vsel %vm704, %v614, %v768
    %v833 = vsel %vm705, %v619, %v769
    %v834 = vsel %vm706, %v622, %v770
    %v835 = vsel %vm707, %v627, %v771
    %v836 = vsel %vm708, %v630, %v772
    %v837 = vsel %vm709, %v635, %v773
    %v838 = vsel %vm710, %v638, %v774
    %v839 = vsel %vm711, %v643, %v775
    %v840 = vsel %vm712, %v646, %v776
    %v841 = vpack.c.bf16 %v778, %v777
    %v842 = vpack.c.bf16 %v780, %v779
    %v843 = vpack.c.bf16 %v782, %v781
    %v844 = vpack.c.bf16 %v784, %v783
    %v845 = vpack.c.bf16 %v786, %v785
    %v846 = vpack.c.bf16 %v788, %v787
    %v847 = vpack.c.bf16 %v790, %v789
    %v848 = vpack.c.bf16 %v792, %v791
    %v849 = vpack.c.bf16 %v794, %v793
    %v850 = vpack.c.bf16 %v796, %v795
    %v851 = vpack.c.bf16 %v798, %v797
    %v852 = vpack.c.bf16 %v800, %v799
    %v853 = vpack.c.bf16 %v802, %v801
    %v854 = vpack.c.bf16 %v804, %v803
    %v855 = vpack.c.bf16 %v806, %v805
    %v856 = vpack.c.bf16 %v808, %v807
    %v857 = vpack.c.bf16 %v810, %v809
    %v858 = vpack.c.bf16 %v812, %v811
    %v859 = vpack.c.bf16 %v814, %v813
    %v860 = vpack.c.bf16 %v816, %v815
    %v861 = vpack.c.bf16 %v818, %v817
    %v862 = vpack.c.bf16 %v820, %v819
    %v863 = vpack.c.bf16 %v822, %v821
    %v864 = vpack.c.bf16 %v824, %v823
    %v865 = vpack.c.bf16 %v826, %v825
    %v866 = vpack.c.bf16 %v828, %v827
    %v867 = vpack.c.bf16 %v830, %v829
    %v868 = vpack.c.bf16 %v832, %v831
    %v869 = vpack.c.bf16 %v834, %v833
    %v870 = vpack.c.bf16 %v836, %v835
    %v871 = vpack.c.bf16 %v838, %v837
    %v872 = vpack.c.bf16 %v840, %v839
    %v905 = vunpack.c.l.b16 %v841
    %v906 = vunpack.c.h.b16 %v841
    %v907 = vunpack.c.l.b16 %v842
    %v908 = vunpack.c.h.b16 %v842
    %v909 = vunpack.c.l.b16 %v843
    %v910 = vunpack.c.h.b16 %v843
    %v911 = vunpack.c.l.b16 %v844
    %v912 = vunpack.c.h.b16 %v844
    %v913 = vunpack.c.l.b16 %v845
    %v914 = vunpack.c.h.b16 %v845
    %v915 = vunpack.c.l.b16 %v846
    %v916 = vunpack.c.h.b16 %v846
    %v917 = vunpack.c.l.b16 %v847
    %v918 = vunpack.c.h.b16 %v847
    %v919 = vunpack.c.l.b16 %v848
    %v920 = vunpack.c.h.b16 %v848
    %v921 = vunpack.c.l.b16 %v849
    %v922 = vunpack.c.h.b16 %v849
    %v923 = vunpack.c.l.b16 %v850
    %v924 = vunpack.c.h.b16 %v850
    %v925 = vunpack.c.l.b16 %v851
    %v926 = vunpack.c.h.b16 %v851
    %v927 = vunpack.c.l.b16 %v852
    %v928 = vunpack.c.h.b16 %v852
    %v929 = vunpack.c.l.b16 %v853
    %v930 = vunpack.c.h.b16 %v853
    %v931 = vunpack.c.l.b16 %v854
    %v932 = vunpack.c.h.b16 %v854
    %v933 = vunpack.c.l.b16 %v855
    %v934 = vunpack.c.h.b16 %v855
    %v935 = vunpack.c.l.b16 %v856
    %v936 = vunpack.c.h.b16 %v856
    %v937 = vunpack.c.l.b16 %v857
    %v938 = vunpack.c.h.b16 %v857
    %v939 = vunpack.c.l.b16 %v858
    %v940 = vunpack.c.h.b16 %v858
    %v941 = vunpack.c.l.b16 %v859
    %v942 = vunpack.c.h.b16 %v859
    %v943 = vunpack.c.l.b16 %v860
    %v944 = vunpack.c.h.b16 %v860
    %v945 = vunpack.c.l.b16 %v861
    %v946 = vunpack.c.h.b16 %v861
    %v947 = vunpack.c.l.b16 %v862
    %v948 = vunpack.c.h.b16 %v862
    %v949 = vunpack.c.l.b16 %v863
    %v950 = vunpack.c.h.b16 %v863
    %v951 = vunpack.c.l.b16 %v864
    %v952 = vunpack.c.h.b16 %v864
    %v953 = vunpack.c.l.b16 %v865
    %v954 = vunpack.c.h.b16 %v865
    %v955 = vunpack.c.l.b16 %v866
    %v956 = vunpack.c.h.b16 %v866
    %v957 = vunpack.c.l.b16 %v867
    %v958 = vunpack.c.h.b16 %v867
    %v959 = vunpack.c.l.b16 %v868
    %v960 = vunpack.c.h.b16 %v868
    %v961 = vunpack.c.l.b16 %v869
    %v962 = vunpack.c.h.b16 %v869
    %v963 = vunpack.c.l.b16 %v870
    %v964 = vunpack.c.h.b16 %v870
    %v965 = vunpack.c.l.b16 %v871
    %v966 = vunpack.c.h.b16 %v871
    %v967 = vunpack.c.l.b16 %v872
    %v968 = vunpack.c.h.b16 %v872
    %v969 = vpack.c.b16 %v905, %v905
    %v970 = vpack.c.b16 %v906, %v906
    %v971 = vpack.c.b16 %v907, %v907
    %v972 = vpack.c.b16 %v908, %v908
    %v973 = vpack.c.b16 %v909, %v909
    %v974 = vpack.c.b16 %v910, %v910
    %v975 = vpack.c.b16 %v911, %v911
    %v976 = vpack.c.b16 %v912, %v912
    %v977 = vpack.c.b16 %v913, %v913
    %v978 = vpack.c.b16 %v914, %v914
    %v979 = vpack.c.b16 %v915, %v915
    %v980 = vpack.c.b16 %v916, %v916
    %v981 = vpack.c.b16 %v917, %v917
    %v982 = vpack.c.b16 %v918, %v918
    %v983 = vpack.c.b16 %v919, %v919
    %v984 = vpack.c.b16 %v920, %v920
    %v985 = vpack.c.b16 %v921, %v921
    %v986 = vpack.c.b16 %v922, %v922
    %v987 = vpack.c.b16 %v923, %v923
    %v988 = vpack.c.b16 %v924, %v924
    %v989 = vpack.c.b16 %v925, %v925
    %v990 = vpack.c.b16 %v926, %v926
    %v991 = vpack.c.b16 %v927, %v927
    %v992 = vpack.c.b16 %v928, %v928
    %v993 = vpack.c.b16 %v929, %v929
    %v994 = vpack.c.b16 %v930, %v930
    %v995 = vpack.c.b16 %v931, %v931
    %v996 = vpack.c.b16 %v932, %v932
    %v997 = vpack.c.b16 %v933, %v933
    %v998 = vpack.c.b16 %v934, %v934
    %v999 = vpack.c.b16 %v935, %v935
    %v1000 = vpack.c.b16 %v936, %v936
    %v1001 = vpack.c.b16 %v937, %v937
    %v1002 = vpack.c.b16 %v938, %v938
    %v1003 = vpack.c.b16 %v939, %v939
    %v1004 = vpack.c.b16 %v940, %v940
    %v1005 = vpack.c.b16 %v941, %v941
    %v1006 = vpack.c.b16 %v942, %v942
    %v1007 = vpack.c.b16 %v943, %v943
    %v1008 = vpack.c.b16 %v944, %v944
    %v1009 = vpack.c.b16 %v945, %v945
    %v1010 = vpack.c.b16 %v946, %v946
    %v1011 = vpack.c.b16 %v947, %v947
    %v1012 = vpack.c.b16 %v948, %v948
    %v1013 = vpack.c.b16 %v949, %v949
    %v1014 = vpack.c.b16 %v950, %v950
    %v1015 = vpack.c.b16 %v951, %v951
    %v1016 = vpack.c.b16 %v952, %v952
    %v1017 = vpack.c.b16 %v953, %v953
    %v1018 = vpack.c.b16 %v954, %v954
    %v1019 = vpack.c.b16 %v955, %v955
    %v1020 = vpack.c.b16 %v956, %v956
    %v1021 = vpack.c.b16 %v957, %v957
    %v1022 = vpack.c.b16 %v958, %v958
    %v1023 = vpack.c.b16 %v959, %v959
    %v1024 = vpack.c.b16 %v960, %v960
    %v1025 = vpack.c.b16 %v961, %v961
    %v1026 = vpack.c.b16 %v962, %v962
    %v1027 = vpack.c.b16 %v963, %v963
    %v1028 = vpack.c.b16 %v964, %v964
    %v1029 = vpack.c.b16 %v965, %v965
    %v1030 = vpack.c.b16 %v966, %v966
    %v1031 = vpack.c.b16 %v967, %v967
    %v1032 = vpack.c.b16 %v968, %v968
    %1097 = vst [vmem:[#allocation2] sm:$0xf] %v969
    %1098 = vst [vmem:[#allocation2 + $0x4] sm:$0xf] %v970
    %1099 = vst [vmem:[#allocation2 + $0x8] sm:$0xf] %v971
    %1100 = vst [vmem:[#allocation2 + $0xc] sm:$0xf] %v972
    %1101 = vst [vmem:[#allocation2 + $0x10] sm:$0xf] %v973
    %1102 = vst [vmem:[#allocation2 + $0x14] sm:$0xf] %v974
    %1103 = vst [vmem:[#allocation2 + $0x18] sm:$0xf] %v975
    %1104 = vst [vmem:[#allocation2 + $0x1c] sm:$0xf] %v976
    %1105 = vst [vmem:[#allocation2 + $0x20] sm:$0xf] %v977
    %1106 = vst [vmem:[#allocation2 + $0x24] sm:$0xf] %v978
    %1107 = vst [vmem:[#allocation2 + $0x28] sm:$0xf] %v979
    %1108 = vst [vmem:[#allocation2 + $0x2c] sm:$0xf] %v980
    %1109 = vst [vmem:[#allocation2 + $0x30] sm:$0xf] %v981
    %1110 = vst [vmem:[#allocation2 + $0x34] sm:$0xf] %v982
    %1111 = vst [vmem:[#allocation2 + $0x38] sm:$0xf] %v983
    %1112 = vst [vmem:[#allocation2 + $0x3c] sm:$0xf] %v984
    %1113 = vst [vmem:[#allocation2 + $0x40] sm:$0xf] %v985
    %1114 = vst [vmem:[#allocation2 + $0x44] sm:$0xf] %v986
    %1115 = vst [vmem:[#allocation2 + $0x48] sm:$0xf] %v987
    %1116 = vst [vmem:[#allocation2 + $0x4c] sm:$0xf] %v988
    %1117 = vst [vmem:[#allocation2 + $0x50] sm:$0xf] %v989
    %1118 = vst [vmem:[#allocation2 + $0x54] sm:$0xf] %v990
    %1119 = vst [vmem:[#allocation2 + $0x58] sm:$0xf] %v991
    %1120 = vst [vmem:[#allocation2 + $0x5c] sm:$0xf] %v992
    %1121 = vst [vmem:[#allocation2 + $0x60] sm:$0xf] %v993
    %1122 = vst [vmem:[#allocation2 + $0x64] sm:$0xf] %v994
    %1123 = vst [vmem:[#allocation2 + $0x68] sm:$0xf] %v995
    %1124 = vst [vmem:[#allocation2 + $0x6c] sm:$0xf] %v996
    %1125 = vst [vmem:[#allocation2 + $0x70] sm:$0xf] %v997
    %1126 = vst [vmem:[#allocation2 + $0x74] sm:$0xf] %v998
    %1127 = vst [vmem:[#allocation2 + $0x78] sm:$0xf] %v999
    %1128 = vst [vmem:[#allocation2 + $0x7c] sm:$0xf] %v1000
    %1129 = vst [vmem:[#allocation2 + $0x80] sm:$0xf] %v1001
    %1130 = vst [vmem:[#allocation2 + $0x84] sm:$0xf] %v1002
    %1131 = vst [vmem:[#allocation2 + $0x88] sm:$0xf] %v1003
    %1132 = vst [vmem:[#allocation2 + $0x8c] sm:$0xf] %v1004
    %1133 = vst [vmem:[#allocation2 + $0x90] sm:$0xf] %v1005
    %1134 = vst [vmem:[#allocation2 + $0x94] sm:$0xf] %v1006
    %1135 = vst [vmem:[#allocation2 + $0x98] sm:$0xf] %v1007
    %1136 = vst [vmem:[#allocation2 + $0x9c] sm:$0xf] %v1008
    %1137 = vst [vmem:[#allocation2 + $0xa0] sm:$0xf] %v1009
    %1138 = vst [vmem:[#allocation2 + $0xa4] sm:$0xf] %v1010
    %1139 = vst [vmem:[#allocation2 + $0xa8] sm:$0xf] %v1011
    %1140 = vst [vmem:[#allocation2 + $0xac] sm:$0xf] %v1012
    %1141 = vst [vmem:[#allocation2 + $0xb0] sm:$0xf] %v1013
    %1142 = vst [vmem:[#allocation2 + $0xb4] sm:$0xf] %v1014
    %1143 = vst [vmem:[#allocation2 + $0xb8] sm:$0xf] %v1015
    %1144 = vst [vmem:[#allocation2 + $0xbc] sm:$0xf] %v1016
    %1145 = vst [vmem:[#allocation2 + $0xc0] sm:$0xf] %v1017
    %1146 = vst [vmem:[#allocation2 + $0xc4] sm:$0xf] %v1018
    %1147 = vst [vmem:[#allocation2 + $0xc8] sm:$0xf] %v1019
    %1148 = vst [vmem:[#allocation2 + $0xcc] sm:$0xf] %v1020
    %1149 = vst [vmem:[#allocation2 + $0xd0] sm:$0xf] %v1021
    %1150 = vst [vmem:[#allocation2 + $0xd4] sm:$0xf] %v1022
    %1151 = vst [vmem:[#allocation2 + $0xd8] sm:$0xf] %v1023
    %1152 = vst [vmem:[#allocation2 + $0xdc] sm:$0xf] %v1024
    %1153 = vst [vmem:[#allocation2 + $0xe0] sm:$0xf] %v1025
    %1154 = vst [vmem:[#allocation2 + $0xe4] sm:$0xf] %v1026
    %1155 = vst [vmem:[#allocation2 + $0xe8] sm:$0xf] %v1027
    %1156 = vst [vmem:[#allocation2 + $0xec] sm:$0xf] %v1028
    %1157 = vst [vmem:[#allocation2 + $0xf0] sm:$0xf] %v1029
    %1158 = vst [vmem:[#allocation2 + $0xf4] sm:$0xf] %v1030
    %1159 = vst [vmem:[#allocation2 + $0xf8] sm:$0xf] %v1031
    %1160 = vst [vmem:[#allocation2 + $0xfc] sm:$0xf] %v1032
    // Predicated region
    $region14: #{tpu_custom_call.1} parent=1 // pred_check
      _
    $region15: #{tpu_custom_call.1} parent=1 // pred_check_branch
      %1162 = sbr.rel (0) target = $region17
    $region16: #{tpu_custom_call.1} parent=1 // pred_region
      %s1164 = ssub.s32 4096, 4096
      %1165 = vsyncadd [#allocation3], %s1164
      %s1166 = sshll.u32 [#allocation2], 4
      %s1167 = int_to_ptr.vmem [resolvable:$true] %s1166
      %1172 = dma.vmem_to_hbm [thread:$0]  %s1167, 4096, %s3, [#allocation3], 64, 64, 4
    $region17: #{tpu_custom_call.1} parent=1 // pred_fallthru
      _
    // Predicated region
    $region18: #{tpu_custom_call.1} parent=1 // pred_check
      _
    $region19: #{tpu_custom_call.1} parent=1 // pred_check_branch
      %1174 = sbr.rel (0) target = $region21
    $region20: #{tpu_custom_call.1} parent=1 // pred_region
      %1175 = dma.done [#allocation3], 4096
    $region21: #{tpu_custom_call.1} parent=1 // pred_fallthru
      _
    %1176 = vsyncpa [#allocation3], 1

</llo_original>
